<compile_context>
chip_gen: v6e
topology: v6e:2x2x1
jax: 0.10.0
libtpu: 0.0.40
codegen_flags: <defaults>
</compile_context>

<pallas_src>
import functools

import jax
import jax.numpy as jnp
from jax.experimental import pallas as pl
from jax.experimental.pallas import tpu as pltpu

PAD = 128          # padded feature width (one lane tile)
HEAD_SLOT = 32     # lane width reserved per output head in the packed head
MU_O_OFF = 0 * HEAD_SLOT
SIGMA_O_OFF = 1 * HEAD_SLOT
MU_R_OFF = 2 * HEAD_SLOT
SIGMA_R_OFF = 3 * HEAD_SLOT


# ----------------------------------------------------------------------------
# Kernel: full forward pass, 3 stacked matmuls + lane-masked epilogue.
#   x_ref : (TILE_B, 128)      activations
#   w_ref : (3, 128, 128)      [w1, w2, packed-heads]   (y = x @ W)
#   b_ref : (3, 1, 128)        [b1, b2, packed-heads-bias]
#   o_ref : (TILE_B, 128)      packed heads output
# ----------------------------------------------------------------------------
def _model_kernel(x_ref, w_ref, b_ref, o_ref):
    h = x_ref[...]
    # hidden layer 1 + ReLU
    h = jnp.maximum(
        jnp.dot(h, w_ref[0], preferred_element_type=jnp.float32) + b_ref[0], 0.0)
    # hidden layer 2 + ReLU
    h = jnp.maximum(
        jnp.dot(h, w_ref[1], preferred_element_type=jnp.float32) + b_ref[1], 0.0)
    # fused heads: one matmul, then per-lane epilogue.
    y = jnp.dot(h, w_ref[2], preferred_element_type=jnp.float32) + b_ref[2]

    lane = jax.lax.broadcasted_iota(jnp.int32, y.shape, dimension=1)
    is_sigma = jnp.logical_or(
        jnp.logical_and(lane >= SIGMA_O_OFF, lane < MU_R_OFF),   # sigma_o slot
        lane >= SIGMA_R_OFF)                                     # sigma_r slot
    is_mu_r = jnp.logical_and(lane >= MU_R_OFF, lane < SIGMA_R_OFF)

    y = jnp.where(is_sigma, jnp.exp(y), y)      # exp on the sigma slots (EUP)
    y = jnp.where(is_mu_r, y * 5.0, y)          # *5 on the mu_r slot
    o_ref[...] = y


# ----------------------------------------------------------------------------
# Parameter construction (deterministic, PyTorch-style uniform init),
# packed into a single (3, 128, 128) weight and (3, 1, 128) bias tensor.
# ----------------------------------------------------------------------------
def _init_linear(key, fan_in, fan_out):
    kw, kb = jax.random.split(key)
    bound = 1.0 / jnp.sqrt(jnp.float32(fan_in))
    w = jax.random.uniform(kw, (fan_in, fan_out), jnp.float32, -bound, bound)
    b = jax.random.uniform(kb, (fan_out,), jnp.float32, -bound, bound)
    return w, b


def init_model_params(key, input_dim, hidden_dims, obs_dim):
    assert len(hidden_dims) == 2, "kernel is written for hidden_dims of length 2"
    h1, h2 = hidden_dims
    assert input_dim <= PAD and h1 <= PAD and h2 <= PAD
    assert obs_dim <= HEAD_SLOT, "packed-head layout needs obs_dim <= 32"

    keys = jax.random.split(key, 6)
    w1, b1 = _init_linear(keys[0], input_dim, h1)
    w2, b2 = _init_linear(keys[1], h1, h2)
    wmo, bmo = _init_linear(keys[2], h2, obs_dim)
    wso, bso = _init_linear(keys[3], h2, obs_dim)
    wmr, bmr = _init_linear(keys[4], h2, 1)
    wsr, bsr = _init_linear(keys[5], h2, 1)

    W = jnp.zeros((3, PAD, PAD), jnp.float32)
    B = jnp.zeros((3, 1, PAD), jnp.float32)

    # hidden layers
    W = W.at[0, :input_dim, :h1].set(w1)
    B = B.at[0, 0, :h1].set(b1)
    W = W.at[1, :h1, :h2].set(w2)
    B = B.at[1, 0, :h2].set(b2)
    # fused heads at lane offsets 0 / 32 / 64 / 96
    W = W.at[2, :h2, MU_O_OFF:MU_O_OFF + obs_dim].set(wmo)
    B = B.at[2, 0, MU_O_OFF:MU_O_OFF + obs_dim].set(bmo)
    W = W.at[2, :h2, SIGMA_O_OFF:SIGMA_O_OFF + obs_dim].set(wso)
    B = B.at[2, 0, SIGMA_O_OFF:SIGMA_O_OFF + obs_dim].set(bso)
    W = W.at[2, :h2, MU_R_OFF:MU_R_OFF + 1].set(wmr)
    B = B.at[2, 0, MU_R_OFF:MU_R_OFF + 1].set(bmr)
    W = W.at[2, :h2, SIGMA_R_OFF:SIGMA_R_OFF + 1].set(wsr)
    B = B.at[2, 0, SIGMA_R_OFF:SIGMA_R_OFF + 1].set(bsr)

    return {"w": W, "b": B}


# ----------------------------------------------------------------------------
# Wrapper: concat obs/action, pad, call pallas kernel over a batch grid,
# slice the four heads from the single packed output.
# ----------------------------------------------------------------------------
@functools.partial(jax.jit, static_argnames=("obs_dim",))
def model_forward(observation, action, params, *, obs_dim):
    x = jnp.concatenate([observation, action], axis=-1).astype(jnp.float32)
    B, D = x.shape

    # Batch tile: 256 rows per grid step at realistic MBPO batch sizes
    # (fills the 256-wide MXU M dim on v6e/v7x, fits easily in v7x's VMEM);
    # for tiny batches just round up to a sublane multiple and use one step.
    if B >= 256:
        tile_b = 256
    else:
        tile_b = max(8, -(-B // 8) * 8)          # round up to multiple of 8
    b_pad = -(-B // tile_b) * tile_b

    # Single pad of the concatenated input (no extra zero-buffer + scatter).
    x_p = jnp.pad(x, ((0, b_pad - B), (0, PAD - D)))

    grid = (b_pad // tile_b,)
    out_p = pl.pallas_call(
        _model_kernel,
        out_shape=jax.ShapeDtypeStruct((b_pad, PAD), jnp.float32),
        grid=grid,
        in_specs=[
            pl.BlockSpec((tile_b, PAD), lambda i: (i, 0)),      # x: tiled batch
            pl.BlockSpec((3, PAD, PAD), lambda i: (0, 0, 0)),   # weights: resident
            pl.BlockSpec((3, 1, PAD), lambda i: (0, 0, 0)),     # biases: resident
        ],
        out_specs=pl.BlockSpec((tile_b, PAD), lambda i: (i, 0)),
        compiler_params=pltpu.CompilerParams(
            dimension_semantics=("parallel",)),
    )(x_p, params["w"], params["b"])

    mu_o = out_p[:B, MU_O_OFF:MU_O_OFF + obs_dim]
    sigma_o = out_p[:B, SIGMA_O_OFF:SIGMA_O_OFF + obs_dim]
    mu_r = out_p[:B, MU_R_OFF:MU_R_OFF + 1]
    sigma_r = out_p[:B, SIGMA_R_OFF:SIGMA_R_OFF + 1]
    return ((mu_o, sigma_o), (mu_r, sigma_r))


# Pure-JAX reference for a correctness sanity check (unpacks the same params).
def _reference_forward(observation, action, params, *, input_dim, hidden_dims, obs_dim):
    h1, h2 = hidden_dims
    W, Bp = params["w"], params["b"]
    x = jnp.concatenate([observation, action], axis=-1).astype(jnp.float32)
    h = jnp.maximum(x @ W[0, :input_dim, :h1] + Bp[0, 0, :h1], 0.0)
    h = jnp.maximum(h @ W[1, :h1, :h2] + Bp[1, 0, :h2], 0.0)
    mu_o = h @ W[2, :h2, MU_O_OFF:MU_O_OFF + obs_dim] + Bp[2, 0, MU_O_OFF:MU_O_OFF + obs_dim]
    sigma_o = jnp.exp(
        h @ W[2, :h2, SIGMA_O_OFF:SIGMA_O_OFF + obs_dim]
        + Bp[2, 0, SIGMA_O_OFF:SIGMA_O_OFF + obs_dim])
    mu_r = (h @ W[2, :h2, MU_R_OFF:MU_R_OFF + 1] + Bp[2, 0, MU_R_OFF:MU_R_OFF + 1]) * 5.0
    sigma_r = jnp.exp(
        h @ W[2, :h2, SIGMA_R_OFF:SIGMA_R_OFF + 1] + Bp[2, 0, SIGMA_R_OFF:SIGMA_R_OFF + 1])
    return ((mu_o, sigma_o), (mu_r, sigma_r))


if __name__ == "__main__":
    # Pendulum-v1-like sizes: obs_dim=3, action_dim=1, two hidden layers of 32.
    obs_dim, act_dim = 3, 1
    hidden_dims = (32, 32)
    input_dim = obs_dim + act_dim
    batch = 8

    key = jax.random.PRNGKey(0)
    k_params, k_obs, k_act = jax.random.split(key, 3)

    params = init_model_params(k_params, input_dim, hidden_dims, obs_dim)
    observation = jax.random.normal(k_obs, (batch, obs_dim), jnp.float32)
    action = jax.random.normal(k_act, (batch, act_dim), jnp.float32)

    (mu_o, sigma_o), (mu_r, sigma_r) = model_forward(
        observation, action, params, obs_dim=obs_dim)
    jax.block_until_ready((mu_o, sigma_o, mu_r, sigma_r))

    # sanity check against pure-JAX reference
    (rmu_o, rsig_o), (rmu_r, rsig_r) = _reference_forward(
        observation, action, params,
        input_dim=input_dim, hidden_dims=hidden_dims, obs_dim=obs_dim)
    assert mu_o.shape == (batch, obs_dim) and sigma_o.shape == (batch, obs_dim)
    assert mu_r.shape == (batch, 1) and sigma_r.shape == (batch, 1)
    assert jnp.allclose(mu_o, rmu_o, atol=1e-5)
    assert jnp.allclose(sigma_o, rsig_o, atol=1e-5)
    assert jnp.allclose(mu_r, rmu_r, atol=1e-5)
    assert jnp.allclose(sigma_r, rsig_r, atol=1e-5)

    print("KERNEL_OK")
</pallas_src>

<mosaic_0001>
module attributes {stable_mosaic.version = 11 : i64} {
  func.func @_model_kernel(%arg0: i32, %arg1: memref<8x128xf32, #tpu.memory_space<vmem>>, %arg2: memref<3x128x128xf32, #tpu.memory_space<vmem>>, %arg3: memref<3x1x128xf32, #tpu.memory_space<vmem>>, %arg4: memref<8x128xf32, #tpu.memory_space<vmem>>) attributes {dimension_semantics = [#tpu.dimension_semantics<parallel>], iteration_bounds = array<i64: 1>, scalar_prefetch = 0 : i64, scratch_operands = 0 : i64, tpu.core_type = #tpu.core_type<tc>, window_params = [{transform_indices = @transform_0, window_bounds = array<i64: 8, 128>}, {pipeline_mode = #tpu.pipeline_mode<synchronous>, transform_indices = @transform_1, window_bounds = array<i64: 3, 128, 128>}, {pipeline_mode = #tpu.pipeline_mode<synchronous>, transform_indices = @transform_2, window_bounds = array<i64: 3, 1, 128>}, {transform_indices = @transform_3, window_bounds = array<i64: 8, 128>}]} {
    %c0 = arith.constant 0 : index
    %c0_0 = arith.constant 0 : index
    %0 = vector.load %arg1[%c0, %c0_0] : memref<8x128xf32, #tpu.memory_space<vmem>>, vector<8x128xf32>
    %c0_1 = arith.constant 0 : index
    %c0_2 = arith.constant 0 : index
    %c0_3 = arith.constant 0 : index
    %1 = vector.load %arg2[%c0_1, %c0_2, %c0_3] : memref<3x128x128xf32, #tpu.memory_space<vmem>>, vector<1x128x128xf32>
    %2 = vector.shape_cast %1 : vector<1x128x128xf32> to vector<128x128xf32>
    %cst = arith.constant dense<0.000000e+00> : vector<8x128xf32>
    %3 = tpu.matmul %0, %2, %cst {dimension_numbers = #tpu.dot_dimension_numbers<[1], [0], [0], [1], [0, 0, 1, 1], [], []>} : vector<8x128xf32>, vector<128x128xf32>, vector<8x128xf32> -> vector<8x128xf32>
    %c0_4 = arith.constant 0 : index
    %c0_5 = arith.constant 0 : index
    %c0_6 = arith.constant 0 : index
    %4 = vector.load %arg3[%c0_4, %c0_5, %c0_6] : memref<3x1x128xf32, #tpu.memory_space<vmem>>, vector<1x1x128xf32>
    %5 = vector.shape_cast %4 : vector<1x1x128xf32> to vector<1x128xf32>
    %6 = vector.broadcast %5 : vector<1x128xf32> to vector<8x128xf32>
    %7 = arith.addf %3, %6 : vector<8x128xf32>
    %cst_7 = arith.constant 0.000000e+00 : f32
    %8 = vector.broadcast %cst_7 : f32 to vector<8x128xf32>
    %9 = arith.maximumf %7, %8 : vector<8x128xf32>
    %c1 = arith.constant 1 : index
    %c0_8 = arith.constant 0 : index
    %c0_9 = arith.constant 0 : index
    %10 = vector.load %arg2[%c1, %c0_8, %c0_9] : memref<3x128x128xf32, #tpu.memory_space<vmem>>, vector<1x128x128xf32>
    %11 = vector.shape_cast %10 : vector<1x128x128xf32> to vector<128x128xf32>
    %cst_10 = arith.constant dense<0.000000e+00> : vector<8x128xf32>
    %12 = tpu.matmul %9, %11, %cst_10 {dimension_numbers = #tpu.dot_dimension_numbers<[1], [0], [0], [1], [0, 0, 1, 1], [], []>} : vector<8x128xf32>, vector<128x128xf32>, vector<8x128xf32> -> vector<8x128xf32>
    %c1_11 = arith.constant 1 : index
    %c0_12 = arith.constant 0 : index
    %c0_13 = arith.constant 0 : index
    %13 = vector.load %arg3[%c1_11, %c0_12, %c0_13] : memref<3x1x128xf32, #tpu.memory_space<vmem>>, vector<1x1x128xf32>
    %14 = vector.shape_cast %13 : vector<1x1x128xf32> to vector<1x128xf32>
    %15 = vector.broadcast %14 : vector<1x128xf32> to vector<8x128xf32>
    %16 = arith.addf %12, %15 : vector<8x128xf32>
    %cst_14 = arith.constant 0.000000e+00 : f32
    %17 = vector.broadcast %cst_14 : f32 to vector<8x128xf32>
    %18 = arith.maximumf %16, %17 : vector<8x128xf32>
    %c2 = arith.constant 2 : index
    %c0_15 = arith.constant 0 : index
    %c0_16 = arith.constant 0 : index
    %19 = vector.load %arg2[%c2, %c0_15, %c0_16] : memref<3x128x128xf32, #tpu.memory_space<vmem>>, vector<1x128x128xf32>
    %20 = vector.shape_cast %19 : vector<1x128x128xf32> to vector<128x128xf32>
    %cst_17 = arith.constant dense<0.000000e+00> : vector<8x128xf32>
    %21 = tpu.matmul %18, %20, %cst_17 {dimension_numbers = #tpu.dot_dimension_numbers<[1], [0], [0], [1], [0, 0, 1, 1], [], []>} : vector<8x128xf32>, vector<128x128xf32>, vector<8x128xf32> -> vector<8x128xf32>
    %c2_18 = arith.constant 2 : index
    %c0_19 = arith.constant 0 : index
    %c0_20 = arith.constant 0 : index
    %22 = vector.load %arg3[%c2_18, %c0_19, %c0_20] : memref<3x1x128xf32, #tpu.memory_space<vmem>>, vector<1x1x128xf32>
    %23 = vector.shape_cast %22 : vector<1x1x128xf32> to vector<1x128xf32>
    %24 = vector.broadcast %23 : vector<1x128xf32> to vector<8x128xf32>
    %25 = arith.addf %21, %24 : vector<8x128xf32>
    %26 = tpu.iota {dimensions = array<i32: 1>} : vector<8x128xi32>
    %c32_i32 = arith.constant 32 : i32
    %27 = vector.broadcast %c32_i32 : i32 to vector<8x128xi32>
    %28 = arith.cmpi sge, %26, %27 : vector<8x128xi32>
    %c64_i32 = arith.constant 64 : i32
    %29 = vector.broadcast %c64_i32 : i32 to vector<8x128xi32>
    %30 = arith.cmpi slt, %26, %29 : vector<8x128xi32>
    %31 = arith.andi %28, %30 : vector<8x128xi1>
    %c96_i32 = arith.constant 96 : i32
    %32 = vector.broadcast %c96_i32 : i32 to vector<8x128xi32>
    %33 = arith.cmpi sge, %26, %32 : vector<8x128xi32>
    %34 = arith.ori %31, %33 : vector<8x128xi1>
    %c64_i32_21 = arith.constant 64 : i32
    %35 = vector.broadcast %c64_i32_21 : i32 to vector<8x128xi32>
    %36 = arith.cmpi sge, %26, %35 : vector<8x128xi32>
    %c96_i32_22 = arith.constant 96 : i32
    %37 = vector.broadcast %c96_i32_22 : i32 to vector<8x128xi32>
    %38 = arith.cmpi slt, %26, %37 : vector<8x128xi32>
    %39 = arith.andi %36, %38 : vector<8x128xi1>
    %40 = math.exp %25 : vector<8x128xf32>
    %41 = arith.select %34, %40, %25 : vector<8x128xi1>, vector<8x128xf32>
    %cst_23 = arith.constant 5.000000e+00 : f32
    %42 = vector.broadcast %cst_23 : f32 to vector<8x128xf32>
    %43 = arith.mulf %41, %42 : vector<8x128xf32>
    %44 = arith.select %39, %43, %41 : vector<8x128xi1>, vector<8x128xf32>
    %c0_24 = arith.constant 0 : index
    %c0_25 = arith.constant 0 : index
    %45 = vector.load %arg4[%c0_24, %c0_25] : memref<8x128xf32, #tpu.memory_space<vmem>>, vector<8x128xf32>
    tpu.vector_store %arg4[%c0_24, %c0_25], %44 {strides = array<i32>} : memref<8x128xf32, #tpu.memory_space<vmem>>, vector<8x128xf32>,
    return
  }
  func.func @transform_0(%arg0: i32) -> (i32, i32) {
    %c0_i32 = arith.constant 0 : i32
    %c0_i32_0 = arith.constant 0 : i32
    return %arg0, %c0_i32 : i32, i32
  }
  func.func @transform_1(%arg0: i32) -> (i32, i32, i32) {
    %c0_i32 = arith.constant 0 : i32
    %c0_i32_0 = arith.constant 0 : i32
    %c0_i32_1 = arith.constant 0 : i32
    %c0_i32_2 = arith.constant 0 : i32
    return %c0_i32, %c0_i32_0, %c0_i32_1 : i32, i32, i32
  }
  func.func @transform_2(%arg0: i32) -> (i32, i32, i32) {
    %c0_i32 = arith.constant 0 : i32
    %c0_i32_0 = arith.constant 0 : i32
    %c0_i32_1 = arith.constant 0 : i32
    %c0_i32_2 = arith.constant 0 : i32
    return %c0_i32, %c0_i32_0, %c0_i32_1 : i32, i32, i32
  }
  func.func @transform_3(%arg0: i32) -> (i32, i32) {
    %c0_i32 = arith.constant 0 : i32
    %c0_i32_0 = arith.constant 0 : i32
    return %arg0, %c0_i32 : i32, i32
  }
}

</mosaic_0001>

<llo_original>
// kernel: model_forward.1
$region0: #{model_forward.1}
  #allocation0 [shape = 'u32[]', space=smem, size = 0x4, offset = 0x4, fixed_abs, tag = 'smem constant byte address 0x4 - core index']
  #allocation1 [shape = 'u32[144,128]{1,0:T(1,128)}', space=vmem, size = 0x12000, scoped, tag = 'internal scratch']
  %s0 = inlined_call_operand.vmem [shape: f32[8,128], index: 0, kind: input, shape index: {}]
  %s1 = inlined_call_operand.hbm [shape: f32[3,128,128], index: 1, kind: input, shape index: {}]
  %s2 = inlined_call_operand.vmem [shape: f32[3,1,128], index: 2, kind: input, shape index: {}]
  %s3 = inlined_call_operand.vmem [shape: f32[8,128], index: 3, kind: output, shape index: {}]
  %s4 = sld [smem:[#allocation0]]
  $region26: #{model_forward.1} parent=0
    _
  %s6 = ssub.s32 1, %s4
  %s7 = scalar_select 0, %s6, %s4
  $region1: #{model_forward.1} parent=0
    #allocation2 [shape = 'u8[196608]{0}', space=vmem, size = 0x30000, scoped, tag = 'input window, operand 1, single buffered']
    #allocation3 [shape = 's32[1]{0}', space=sflag, size = 0x4, scoped, tag = 'scoped memory for model_forward.1']
    %8 = vsyncpa [#allocation3], 0
    // Predicated region
    $region2: #{model_forward.1} parent=1 // pred_check
      _
    $region3: #{model_forward.1} parent=1 // pred_check_branch
      %10 = sbr.rel (0) target = $region5
    $region4: #{model_forward.1} parent=1 // pred_region
      _
    $region5: #{model_forward.1} parent=1 // pred_fallthru
      _
    // Predicated region
    $region6: #{model_forward.1} parent=1 // pred_check
      _
    $region7: #{model_forward.1} parent=1 // pred_check_branch
      %12 = sbr.rel (0) target = $region9
    $region8: #{model_forward.1} parent=1 // pred_region
      %s14 = ssub.s32 6144, 6144
      %15 = vsyncadd [#allocation3], %s14
      %s16 = sshll.u32 [#allocation2], 4
      %s17 = int_to_ptr.vmem [resolvable:$true] %s16
      %22 = dma.hbm_to_vmem [thread:$0]  %s1, 6144, %s17, [#allocation3], 128, 128, 8
    $region9: #{model_forward.1} parent=1 // pred_fallthru
      _
    // Predicated region
    $region10: #{model_forward.1} parent=1 // pred_check
      _
    $region11: #{model_forward.1} parent=1 // pred_check_branch
      %24 = sbr.rel (0) target = $region13
    $region12: #{model_forward.1} parent=1 // pred_region
      _
    $region13: #{model_forward.1} parent=1 // pred_fallthru
      _
    // Predicated region
    $region14: #{model_forward.1} parent=1 // pred_check
      _
    $region15: #{model_forward.1} parent=1 // pred_check_branch
      %26 = sbr.rel (0) target = $region17
    $region16: #{model_forward.1} parent=1 // pred_region
      %27 = dma.done [#allocation3], 6144
    $region17: #{model_forward.1} parent=1 // pred_fallthru
      _
    %v28 = vld [vmem:[%s0] sm:$0xff]
    %v29 = vld [vmem:[#allocation2] sm:$0xff]
    %v30 = vld [vmem:[#allocation2 + $0x8] sm:$0xff]
    %v31 = vld [vmem:[#allocation2 + $0x10] sm:$0xff]
    %v32 = vld [vmem:[#allocation2 + $0x18] sm:$0xff]
    %v33 = vld [vmem:[#allocation2 + $0x20] sm:$0xff]
    %v34 = vld [vmem:[#allocation2 + $0x28] sm:$0xff]
    %v35 = vld [vmem:[#allocation2 + $0x30] sm:$0xff]
    %v36 = vld [vmem:[#allocation2 + $0x38] sm:$0xff]
    %v37 = vld [vmem:[#allocation2 + $0x40] sm:$0xff]
    %v38 = vld [vmem:[#allocation2 + $0x48] sm:$0xff]
    %v39 = vld [vmem:[#allocation2 + $0x50] sm:$0xff]
    %v40 = vld [vmem:[#allocation2 + $0x58] sm:$0xff]
    %v41 = vld [vmem:[#allocation2 + $0x60] sm:$0xff]
    %v42 = vld [vmem:[#allocation2 + $0x68] sm:$0xff]
    %v43 = vld [vmem:[#allocation2 + $0x70] sm:$0xff]
    %v44 = vld [vmem:[#allocation2 + $0x78] sm:$0xff]
    %v45 = vld [vmem:[%s2] sm:$0x1]
    %v47 = vlaneseq
    %v48 = vshrl.u32 %v47, 7
    %v49 = vsub.s32 0, %v48
    %v50 = vrot.slane %v45, %v49
    %52 = vmatprep.subr.mxu0 0.0
    %53 = vmatpush1.msra.mxu0 %v44
    %54 = vmatprep.subr.mxu0 0.0
    %55 = vmatpush1.msra.mxu0 %v43
    %56 = vmatprep.subr.mxu0 0.0
    %57 = vmatpush1.msra.mxu0 %v42
    %58 = vmatprep.subr.mxu0 0.0
    %59 = vmatpush1.msra.mxu0 %v41
    %60 = vmatprep.subr.mxu0 0.0
    %61 = vmatpush1.msra.mxu0 %v40
    %62 = vmatprep.subr.mxu0 0.0
    %63 = vmatpush1.msra.mxu0 %v39
    %64 = vmatprep.subr.mxu0 0.0
    %65 = vmatpush1.msra.mxu0 %v38
    %66 = vmatprep.subr.mxu0 0.0
    %67 = vmatpush1.msra.mxu0 %v37
    %68 = vmatprep.subr.mxu0 0.0
    %69 = vmatpush1.msra.mxu0 %v36
    %70 = vmatprep.subr.mxu0 0.0
    %71 = vmatpush1.msra.mxu0 %v35
    %72 = vmatprep.subr.mxu0 0.0
    %73 = vmatpush1.msra.mxu0 %v34
    %74 = vmatprep.subr.mxu0 0.0
    %75 = vmatpush1.msra.mxu0 %v33
    %76 = vmatprep.subr.mxu0 0.0
    %77 = vmatpush1.msra.mxu0 %v32
    %78 = vmatprep.subr.mxu0 0.0
    %79 = vmatpush1.msra.mxu0 %v31
    %80 = vmatprep.subr.mxu0 0.0
    %81 = vmatpush1.msra.mxu0 %v30
    %82 = vmatprep.subr.mxu0 0.0
    %83 = vmatpush1.msra.mxu0 %v29
    %84 = vmatprep.subr.mxu0 0.0
    %85 = vmatpush2.msra.mxu0 0.0
    %86 = vmatprep.subr.mxu0 0.0
    %87 = vmatpush2.msra.mxu0 0.0
    %88 = vmatprep.subr.mxu0 0.0
    %89 = vmatpush2.msra.mxu0 0.0
    %90 = vmatprep.subr.mxu0 0.0
    %91 = vmatpush2.msra.mxu0 0.0
    %92 = vmatprep.subr.mxu0 0.0
    %93 = vmatpush2.msra.mxu0 0.0
    %94 = vmatprep.subr.mxu0 0.0
    %95 = vmatpush2.msra.mxu0 0.0
    %96 = vmatprep.subr.mxu0 0.0
    %97 = vmatpush2.msra.mxu0 0.0
    %98 = vmatprep.subr.mxu0 0.0
    %99 = vmatpush2.msra.mxu0 0.0
    %100 = vmatprep.subr.mxu0 0.0
    %101 = vmatpush2.msra.mxu0 0.0
    %102 = vmatprep.subr.mxu0 0.0
    %103 = vmatpush2.msra.mxu0 0.0
    %104 = vmatprep.subr.mxu0 0.0
    %105 = vmatpush2.msra.mxu0 0.0
    %106 = vmatprep.subr.mxu0 0.0
    %107 = vmatpush2.msra.mxu0 0.0
    %108 = vmatprep.subr.mxu0 0.0
    %109 = vmatpush2.msra.mxu0 0.0
    %110 = vmatprep.subr.mxu0 0.0
    %111 = vmatpush2.msra.mxu0 0.0
    %112 = vmatprep.subr.mxu0 0.0
    %113 = vmatpush2.msra.mxu0 0.0
    %114 = vmatprep.subr.mxu0 0.0
    %115 = vmatpush2.msra.mxu0 0.0
    %116 = vmatprep.mubr.f32.mxu0 0.0
    %117 = vmatmul.mubr.f32.gmra.mxu0 %v28
    %v118 = vpop.f32.mrf.mxu0
    %v119 = vadd.f32 %v50, %v118
    %v120 = vpop.f32.mrf.mxu0
    %121 = vdwg.mxu0
    %v122 = vmax.f32 %v119, 0.0
    %s123 = scalar_lea.vmem [#allocation2], 128
    %v124 = vld [vmem:[%s123] sm:$0xff]
    %v125 = vld [vmem:[%s123 + $0x8] sm:$0xff]
    %v126 = vld [vmem:[%s123 + $0x10] sm:$0xff]
    %v127 = vld [vmem:[%s123 + $0x18] sm:$0xff]
    %v128 = vld [vmem:[%s123 + $0x20] sm:$0xff]
    %v129 = vld [vmem:[%s123 + $0x28] sm:$0xff]
    %v130 = vld [vmem:[%s123 + $0x30] sm:$0xff]
    %v131 = vld [vmem:[%s123 + $0x38] sm:$0xff]
    %v132 = vld [vmem:[%s123 + $0x40] sm:$0xff]
    %v133 = vld [vmem:[%s123 + $0x48] sm:$0xff]
    %v134 = vld [vmem:[%s123 + $0x50] sm:$0xff]
    %v135 = vld [vmem:[%s123 + $0x58] sm:$0xff]
    %v136 = vld [vmem:[%s123 + $0x60] sm:$0xff]
    %v137 = vld [vmem:[%s123 + $0x68] sm:$0xff]
    %v138 = vld [vmem:[%s123 + $0x70] sm:$0xff]
    %v139 = vld [vmem:[%s123 + $0x78] sm:$0xff]
    %s140 = scalar_lea.vmem %s2, 1
    %v141 = vld [vmem:[%s140] sm:$0x1]
    %v143 = vlaneseq
    %v144 = vshrl.u32 %v143, 7
    %v145 = vsub.s32 0, %v144
    %v146 = vrot.slane %v141, %v145
    %148 = vmatprep.subr.mxu0 0.0
    %149 = vmatpush1.msra.mxu0 %v139
    %150 = vmatprep.subr.mxu0 0.0
    %151 = vmatpush1.msra.mxu0 %v138
    %152 = vmatprep.subr.mxu0 0.0
    %153 = vmatpush1.msra.mxu0 %v137
    %154 = vmatprep.subr.mxu0 0.0
    %155 = vmatpush1.msra.mxu0 %v136
    %156 = vmatprep.subr.mxu0 0.0
    %157 = vmatpush1.msra.mxu0 %v135
    %158 = vmatprep.subr.mxu0 0.0
    %159 = vmatpush1.msra.mxu0 %v134
    %160 = vmatprep.subr.mxu0 0.0
    %161 = vmatpush1.msra.mxu0 %v133
    %162 = vmatprep.subr.mxu0 0.0
    %163 = vmatpush1.msra.mxu0 %v132
    %164 = vmatprep.subr.mxu0 0.0
    %165 = vmatpush1.msra.mxu0 %v131
    %166 = vmatprep.subr.mxu0 0.0
    %167 = vmatpush1.msra.mxu0 %v130
    %168 = vmatprep.subr.mxu0 0.0
    %169 = vmatpush1.msra.mxu0 %v129
    %170 = vmatprep.subr.mxu0 0.0
    %171 = vmatpush1.msra.mxu0 %v128
    %172 = vmatprep.subr.mxu0 0.0
    %173 = vmatpush1.msra.mxu0 %v127
    %174 = vmatprep.subr.mxu0 0.0
    %175 = vmatpush1.msra.mxu0 %v126
    %176 = vmatprep.subr.mxu0 0.0
    %177 = vmatpush1.msra.mxu0 %v125
    %178 = vmatprep.subr.mxu0 0.0
    %179 = vmatpush1.msra.mxu0 %v124
    %180 = vmatprep.subr.mxu0 0.0
    %181 = vmatpush2.msra.mxu0 0.0
    %182 = vmatprep.subr.mxu0 0.0
    %183 = vmatpush2.msra.mxu0 0.0
    %184 = vmatprep.subr.mxu0 0.0
    %185 = vmatpush2.msra.mxu0 0.0
    %186 = vmatprep.subr.mxu0 0.0
    %187 = vmatpush2.msra.mxu0 0.0
    %188 = vmatprep.subr.mxu0 0.0
    %189 = vmatpush2.msra.mxu0 0.0
    %190 = vmatprep.subr.mxu0 0.0
    %191 = vmatpush2.msra.mxu0 0.0
    %192 = vmatprep.subr.mxu0 0.0
    %193 = vmatpush2.msra.mxu0 0.0
    %194 = vmatprep.subr.mxu0 0.0
    %195 = vmatpush2.msra.mxu0 0.0
    %196 = vmatprep.subr.mxu0 0.0
    %197 = vmatpush2.msra.mxu0 0.0
    %198 = vmatprep.subr.mxu0 0.0
    %199 = vmatpush2.msra.mxu0 0.0
    %200 = vmatprep.subr.mxu0 0.0
    %201 = vmatpush2.msra.mxu0 0.0
    %202 = vmatprep.subr.mxu0 0.0
    %203 = vmatpush2.msra.mxu0 0.0
    %204 = vmatprep.subr.mxu0 0.0
    %205 = vmatpush2.msra.mxu0 0.0
    %206 = vmatprep.subr.mxu0 0.0
    %207 = vmatpush2.msra.mxu0 0.0
    %208 = vmatprep.subr.mxu0 0.0
    %209 = vmatpush2.msra.mxu0 0.0
    %210 = vmatprep.subr.mxu0 0.0
    %211 = vmatpush2.msra.mxu0 0.0
    %212 = vmatprep.mubr.f32.mxu0 0.0
    %213 = vmatmul.mubr.f32.gmra.mxu0 %v122
    %v214 = vpop.f32.mrf.mxu0
    %v215 = vadd.f32 %v146, %v214
    %v216 = vpop.f32.mrf.mxu0
    %217 = vdwg.mxu0
    %v218 = vmax.f32 %v215, 0.0
    %s219 = scalar_lea.vmem [#allocation2], 256
    %v220 = vld [vmem:[%s219] sm:$0xff]
    %v221 = vld [vmem:[%s219 + $0x8] sm:$0xff]
    %v222 = vld [vmem:[%s219 + $0x10] sm:$0xff]
    %v223 = vld [vmem:[%s219 + $0x18] sm:$0xff]
    %v224 = vld [vmem:[%s219 + $0x20] sm:$0xff]
    %v225 = vld [vmem:[%s219 + $0x28] sm:$0xff]
    %v226 = vld [vmem:[%s219 + $0x30] sm:$0xff]
    %v227 = vld [vmem:[%s219 + $0x38] sm:$0xff]
    %v228 = vld [vmem:[%s219 + $0x40] sm:$0xff]
    %v229 = vld [vmem:[%s219 + $0x48] sm:$0xff]
    %v230 = vld [vmem:[%s219 + $0x50] sm:$0xff]
    %v231 = vld [vmem:[%s219 + $0x58] sm:$0xff]
    %v232 = vld [vmem:[%s219 + $0x60] sm:$0xff]
    %v233 = vld [vmem:[%s219 + $0x68] sm:$0xff]
    %v234 = vld [vmem:[%s219 + $0x70] sm:$0xff]
    %v235 = vld [vmem:[%s219 + $0x78] sm:$0xff]
    %s236 = scalar_lea.vmem %s2, 2
    %v237 = vld [vmem:[%s236] sm:$0x1]
    %v239 = vlaneseq
    %v240 = vshrl.u32 %v239, 7
    %v241 = vsub.s32 0, %v240
    %v242 = vrot.slane %v237, %v241
    %244 = vmatprep.subr.mxu0 0.0
    %245 = vmatpush1.msra.mxu0 %v235
    %246 = vmatprep.subr.mxu0 0.0
    %247 = vmatpush1.msra.mxu0 %v234
    %248 = vmatprep.subr.mxu0 0.0
    %249 = vmatpush1.msra.mxu0 %v233
    %250 = vmatprep.subr.mxu0 0.0
    %251 = vmatpush1.msra.mxu0 %v232
    %252 = vmatprep.subr.mxu0 0.0
    %253 = vmatpush1.msra.mxu0 %v231
    %254 = vmatprep.subr.mxu0 0.0
    %255 = vmatpush1.msra.mxu0 %v230
    %256 = vmatprep.subr.mxu0 0.0
    %257 = vmatpush1.msra.mxu0 %v229
    %258 = vmatprep.subr.mxu0 0.0
    %259 = vmatpush1.msra.mxu0 %v228
    %260 = vmatprep.subr.mxu0 0.0
    %261 = vmatpush1.msra.mxu0 %v227
    %262 = vmatprep.subr.mxu0 0.0
    %263 = vmatpush1.msra.mxu0 %v226
    %264 = vmatprep.subr.mxu0 0.0
    %265 = vmatpush1.msra.mxu0 %v225
    %266 = vmatprep.subr.mxu0 0.0
    %267 = vmatpush1.msra.mxu0 %v224
    %268 = vmatprep.subr.mxu0 0.0
    %269 = vmatpush1.msra.mxu0 %v223
    %270 = vmatprep.subr.mxu0 0.0
    %271 = vmatpush1.msra.mxu0 %v222
    %272 = vmatprep.subr.mxu0 0.0
    %273 = vmatpush1.msra.mxu0 %v221
    %274 = vmatprep.subr.mxu0 0.0
    %275 = vmatpush1.msra.mxu0 %v220
    %276 = vmatprep.subr.mxu0 0.0
    %277 = vmatpush2.msra.mxu0 0.0
    %278 = vmatprep.subr.mxu0 0.0
    %279 = vmatpush2.msra.mxu0 0.0
    %280 = vmatprep.subr.mxu0 0.0
    %281 = vmatpush2.msra.mxu0 0.0
    %282 = vmatprep.subr.mxu0 0.0
    %283 = vmatpush2.msra.mxu0 0.0
    %284 = vmatprep.subr.mxu0 0.0
    %285 = vmatpush2.msra.mxu0 0.0
    %286 = vmatprep.subr.mxu0 0.0
    %287 = vmatpush2.msra.mxu0 0.0
    %288 = vmatprep.subr.mxu0 0.0
    %289 = vmatpush2.msra.mxu0 0.0
    %290 = vmatprep.subr.mxu0 0.0
    %291 = vmatpush2.msra.mxu0 0.0
    %292 = vmatprep.subr.mxu0 0.0
    %293 = vmatpush2.msra.mxu0 0.0
    %294 = vmatprep.subr.mxu0 0.0
    %295 = vmatpush2.msra.mxu0 0.0
    %296 = vmatprep.subr.mxu0 0.0
    %297 = vmatpush2.msra.mxu0 0.0
    %298 = vmatprep.subr.mxu0 0.0
    %299 = vmatpush2.msra.mxu0 0.0
    %300 = vmatprep.subr.mxu0 0.0
    %301 = vmatpush2.msra.mxu0 0.0
    %302 = vmatprep.subr.mxu0 0.0
    %303 = vmatpush2.msra.mxu0 0.0
    %304 = vmatprep.subr.mxu0 0.0
    %305 = vmatpush2.msra.mxu0 0.0
    %306 = vmatprep.subr.mxu0 0.0
    %307 = vmatpush2.msra.mxu0 0.0
    %308 = vmatprep.mubr.f32.mxu0 0.0
    %309 = vmatmul.mubr.f32.gmra.mxu0 %v218
    %v310 = vpop.f32.mrf.mxu0
    %v311 = vadd.f32 %v242, %v310
    %v312 = vpop.f32.mrf.mxu0
    %313 = vdwg.mxu0
    %v314 = vlaneseq
    %v315 = vand.u32 %v314, 127
    %vm316 = vcmp.ge.s32.totalorder %v315, 32
    %vm317 = vcmp.lt.s32.totalorder %v315, 64
    %vm318 = vmand %vm316, %vm317
    %vm319 = vcmp.ge.s32.totalorder %v315, 96
    %vm320 = vmor %vm318, %vm319
    %vm321 = vcmp.ge.s32.totalorder %v315, 64
    %vm322 = vcmp.lt.s32.totalorder %v315, 96
    %vm323 = vmand %vm321, %vm322
    %v324 = vmul.f32 %v311, 1.442695
    %v325 = vpow.pop %v324
    %v326 = vsel %vm320, %v325, %v311
    %v327 = vmul.f32 %v326, 5.0
    %v328 = vsel %vm323, %v327, %v326
    %329 = vst [vmem:[%s3] sm:$0xff] %v328
    // Predicated region
    $region18: #{model_forward.1} parent=1 // pred_check
      _
    $region19: #{model_forward.1} parent=1 // pred_check_branch
      %331 = sbr.rel (0) target = $region21
    $region20: #{model_forward.1} parent=1 // pred_region
      _
    $region21: #{model_forward.1} parent=1 // pred_fallthru
      _
    // Predicated region
    $region22: #{model_forward.1} parent=1 // pred_check
      _
    $region23: #{model_forward.1} parent=1 // pred_check_branch
      %333 = sbr.rel (0) target = $region25
    $region24: #{model_forward.1} parent=1 // pred_region
      _
    $region25: #{model_forward.1} parent=1 // pred_fallthru
      _
    %334 = vsyncpa [#allocation3], 1

</llo_original>
